<compile_context>
chip_gen: v7x
topology: tpu7x:2x2x1
jax: 0.10.0
libtpu: 0.0.40
codegen_flags: <defaults>
</compile_context>

<pallas_src>
import math

import jax
import jax.numpy as jnp
from jax import lax
from jax.experimental import pallas as pl
from jax.experimental.pallas import tpu as pltpu


LANE = 128                      # lane width (last dim of every block)
MAX_BLOCK_ROWS = 4096           # 4096*128*4B = 2 MiB per f32 input block
VMEM_LIMIT_BYTES = 32 * 1024 * 1024


def _round_up(x, m):
    return (x + m - 1) // m * m


def focal_loss(inputs, targets, alpha=0.8, gamma=2.0):
    """Pallas implementation of FocalLoss.forward (the `smooth` arg is unused upstream)."""
    x = inputs.reshape(-1)
    t = targets.reshape(-1)
    n = x.shape[0]

    rem = n % LANE
    if rem:
        # TODO(synk): sub-lane remainder still goes through jnp.pad (full copy);
        # lane-aligned sizes (the common NCHW case) stream with zero wrapper-side
        # data movement.  Pad value is irrelevant -- masked in-kernel by index.
        x = jnp.pad(x, (0, LANE - rem))
        t = jnp.pad(t, (0, LANE - rem))

    rows = x.shape[0] // LANE
    block_rows = min(MAX_BLOCK_ROWS, _round_up(rows, 8))   # multiple of 8 sublanes
    num_tiles = pl.cdiv(rows, block_rows)

    x2 = x.reshape(rows, LANE)
    t2 = t.reshape(rows, LANE)

    def kernel(x_ref, t_ref, o_ref, acc_ref):
        i = pl.program_id(0)

        @pl.when(i == 0)
        def _():
            acc_ref[...] = jnp.zeros_like(acc_ref)

        xv = x_ref[...].astype(jnp.float32)
        tv = t_ref[...].astype(jnp.float32)

        # PyTorch-matching BCE (sigmoid + log clamped at -100) in stable logits form:
        #   log(sigmoid(x))     = -softplus(-x) = x - softplus(x)
        #   log(1 - sigmoid(x)) = -softplus(x)
        sp_pos = jnp.maximum(xv, 0.0) + jnp.log1p(jnp.exp(-jnp.abs(xv)))  # softplus(x)
        log_p = jnp.maximum(xv - sp_pos, -100.0)
        log_1mp = jnp.maximum(-sp_pos, -100.0)
        bce = -(tv * log_p + (1.0 - tv) * log_1mp)

        is_last = i == pl.num_programs(0) - 1

        @pl.when(jnp.logical_not(is_last))
        def _():
            # Full interior tile: every element valid, no mask, pure VALU fold into
            # a single-vreg accumulator.
            acc_ref[...] += bce.reshape(block_rows // 8, 8, LANE).sum(axis=0)

        @pl.when(is_last)
        def _():
            # Tail tile: mask everything whose flat element index >= n.  This covers
            # both the partial last row and any out-of-bounds rows of a partial
            # trailing block (OOB reads are garbage; `where` selects them away).
            base = i * (block_rows * LANE)
            row = lax.broadcasted_iota(jnp.int32, (block_rows, LANE), 0)
            lane = lax.broadcasted_iota(jnp.int32, (block_rows, LANE), 1)
            idx = base + row * LANE + lane
            masked = jnp.where(idx < n, bce, 0.0)
            acc_ref[...] += masked.reshape(block_rows // 8, 8, LANE).sum(axis=0)
            # One cheap 8 -> 1 sublane fold; output stays lane-dense (1, 128).
            o_ref[...] = jnp.sum(acc_ref[...], axis=0, keepdims=True)

    partial = pl.pallas_call(
        kernel,
        out_shape=jax.ShapeDtypeStruct((1, LANE), jnp.float32),
        grid_spec=pltpu.PrefetchScalarGridSpec(
            num_scalar_prefetch=0,
            grid=(num_tiles,),
            in_specs=[
                pl.BlockSpec((block_rows, LANE), lambda i: (i, 0)),
                pl.BlockSpec((block_rows, LANE), lambda i: (i, 0)),
            ],
            out_specs=pl.BlockSpec((1, LANE), lambda i: (0, 0)),
            scratch_shapes=[pltpu.VMEM((8, LANE), jnp.float32)],
        ),
        compiler_params=pltpu.CompilerParams(
            dimension_semantics=("arbitrary",),
            vmem_limit_bytes=VMEM_LIMIT_BYTES,
        ),
    )(x2, t2)

    # Scalar epilogue (~5 flops): cross-lane fold + mean + focal transform.
    bce_mean = jnp.sum(partial) / jnp.float32(n)
    bce_exp = jnp.exp(-bce_mean)
    return jnp.float32(alpha) * (1.0 - bce_exp) ** jnp.float32(gamma) * bce_mean


def _focal_loss_ref(inputs, targets, alpha=0.8, gamma=2.0):
    """Pure-JAX reference matching the PyTorch module (sigmoid + clamped-log BCE)."""
    x = inputs.reshape(-1).astype(jnp.float32)
    t = targets.reshape(-1).astype(jnp.float32)
    p = jax.nn.sigmoid(x)
    log_p = jnp.maximum(jnp.log(p), -100.0)
    log_1mp = jnp.maximum(jnp.log(1.0 - p), -100.0)
    bce = jnp.mean(-(t * log_p + (1.0 - t) * log_1mp))
    return alpha * (1.0 - jnp.exp(-bce)) ** gamma * bce


if __name__ == "__main__":
    key = jax.random.PRNGKey(0)
    k1, k2 = jax.random.split(key)
    # Shapes consistent with a UNet segmentation logit map (NCHW).
    inputs = jax.random.normal(k1, (2, 4, 16, 16), dtype=jnp.float32)
    targets = (jax.random.uniform(k2, (2, 4, 16, 16)) > 0.5).astype(jnp.float32)

    loss = focal_loss(inputs, targets)
    jax.block_until_ready(loss)

    ref = _focal_loss_ref(inputs, targets)
    assert jnp.allclose(loss, ref, rtol=1e-5, atol=1e-5), (loss, ref)
    print("KERNEL_OK")
</pallas_src>

<mosaic_0001>
module attributes {stable_mosaic.version = 11 : i64} {
  func.func @kernel(%arg0: i32, %arg1: memref<16x128xf32, #tpu.memory_space<vmem>>, %arg2: memref<16x128xf32, #tpu.memory_space<vmem>>, %arg3: memref<1x128xf32, #tpu.memory_space<vmem>>, %arg4: memref<8x128xf32, #tpu.memory_space<vmem>>) attributes {dimension_semantics = [#tpu.dimension_semantics<arbitrary>], iteration_bounds = array<i64: 1>, scalar_prefetch = 0 : i64, scratch_operands = 1 : i64, tpu.core_type = #tpu.core_type<tc>, window_params = [{transform_indices = @transform_0, window_bounds = array<i64: 16, 128>}, {transform_indices = @transform_1, window_bounds = array<i64: 16, 128>}, {pipeline_mode = #tpu.pipeline_mode<synchronous>, transform_indices = @transform_2, window_bounds = array<i64: 1, 128>}]} {
    %c0_i32 = arith.constant 0 : i32
    %0 = arith.cmpi eq, %arg0, %c0_i32 : i32
    %1 = arith.extui %0 : i1 to i32
    %c0_i32_0 = arith.constant 0 : i32
    %2 = arith.cmpi ne, %1, %c0_i32_0 : i32
    scf.if %2 {
      %cst_13 = arith.constant 0.000000e+00 : f32
      %33 = vector.broadcast %cst_13 : f32 to vector<8x128xf32>
      %c0_14 = arith.constant 0 : index
      %c0_15 = arith.constant 0 : index
      %34 = vector.load %arg4[%c0_14, %c0_15] : memref<8x128xf32, #tpu.memory_space<vmem>>, vector<8x128xf32>
      tpu.vector_store %arg4[%c0_14, %c0_15], %33 {strides = array<i32>} : memref<8x128xf32, #tpu.memory_space<vmem>>, vector<8x128xf32>,
    } else {
    }
    %c0 = arith.constant 0 : index
    %c0_1 = arith.constant 0 : index
    %3 = vector.load %arg1[%c0, %c0_1] : memref<16x128xf32, #tpu.memory_space<vmem>>, vector<16x128xf32>
    %c0_2 = arith.constant 0 : index
    %c0_3 = arith.constant 0 : index
    %4 = vector.load %arg2[%c0_2, %c0_3] : memref<16x128xf32, #tpu.memory_space<vmem>>, vector<16x128xf32>
    %cst = arith.constant 0.000000e+00 : f32
    %5 = vector.broadcast %cst : f32 to vector<16x128xf32>
    %6 = arith.maximumf %3, %5 : vector<16x128xf32>
    %7 = math.absf %3 : vector<16x128xf32>
    %cst_4 = arith.constant 0.000000e+00 : f32
    %8 = vector.broadcast %cst_4 : f32 to vector<16x128xf32>
    %9 = arith.subf %8, %7 : vector<16x128xf32>
    %10 = math.exp %9 : vector<16x128xf32>
    %11 = math.log1p %10 : vector<16x128xf32>
    %12 = arith.addf %6, %11 : vector<16x128xf32>
    %13 = arith.subf %3, %12 : vector<16x128xf32>
    %cst_5 = arith.constant -1.000000e+02 : f32
    %14 = vector.broadcast %cst_5 : f32 to vector<16x128xf32>
    %15 = arith.maximumf %13, %14 : vector<16x128xf32>
    %cst_6 = arith.constant 0.000000e+00 : f32
    %16 = vector.broadcast %cst_6 : f32 to vector<16x128xf32>
    %17 = arith.subf %16, %12 : vector<16x128xf32>
    %cst_7 = arith.constant -1.000000e+02 : f32
    %18 = vector.broadcast %cst_7 : f32 to vector<16x128xf32>
    %19 = arith.maximumf %17, %18 : vector<16x128xf32>
    %20 = arith.mulf %4, %15 : vector<16x128xf32>
    %cst_8 = arith.constant 1.000000e+00 : f32
    %21 = vector.broadcast %cst_8 : f32 to vector<16x128xf32>
    %22 = arith.subf %21, %4 : vector<16x128xf32>
    %23 = arith.mulf %22, %19 : vector<16x128xf32>
    %24 = arith.addf %20, %23 : vector<16x128xf32>
    %cst_9 = arith.constant 0.000000e+00 : f32
    %25 = vector.broadcast %cst_9 : f32 to vector<16x128xf32>
    %26 = arith.subf %25, %24 : vector<16x128xf32>
    %c0_i32_10 = arith.constant 0 : i32
    %27 = arith.cmpi eq, %arg0, %c0_i32_10 : i32
    %true = arith.constant true
    %28 = arith.xori %27, %true : i1
    %29 = arith.extui %28 : i1 to i32
    %c0_i32_11 = arith.constant 0 : i32
    %30 = arith.cmpi ne, %29, %c0_i32_11 : i32
    scf.if %30 {
      %c0_13 = arith.constant 0 : index
      %c0_14 = arith.constant 0 : index
      %33 = vector.load %arg4[%c0_13, %c0_14] : memref<8x128xf32, #tpu.memory_space<vmem>>, vector<8x128xf32>
      %34 = vector.shape_cast %26 : vector<16x128xf32> to vector<2x8x128xf32>
      %cst_15 = arith.constant dense<0.000000e+00> : vector<8x128xf32>
      %35 = vector.multi_reduction <add>, %34, %cst_15 [0] : vector<2x8x128xf32> to vector<8x128xf32>
      %36 = arith.addf %33, %35 : vector<8x128xf32>
      %c0_16 = arith.constant 0 : index
      %c0_17 = arith.constant 0 : index
      %37 = vector.load %arg4[%c0_16, %c0_17] : memref<8x128xf32, #tpu.memory_space<vmem>>, vector<8x128xf32>
      tpu.vector_store %arg4[%c0_16, %c0_17], %36 {strides = array<i32>} : memref<8x128xf32, #tpu.memory_space<vmem>>, vector<8x128xf32>,
    } else {
    }
    %31 = arith.extui %27 : i1 to i32
    %c0_i32_12 = arith.constant 0 : i32
    %32 = arith.cmpi ne, %31, %c0_i32_12 : i32
    scf.if %32 {
      %c2048_i32 = arith.constant 2048 : i32
      %33 = arith.muli %arg0, %c2048_i32 : i32
      %34 = tpu.iota {dimensions = array<i32: 0>} : vector<16x128xi32>
      %35 = tpu.iota {dimensions = array<i32: 1>} : vector<16x128xi32>
      %c128_i32 = arith.constant 128 : i32
      %36 = vector.broadcast %c128_i32 : i32 to vector<16x128xi32>
      %37 = arith.muli %34, %36 : vector<16x128xi32>
      %38 = vector.broadcast %33 : i32 to vector<16x128xi32>
      %39 = arith.addi %38, %37 : vector<16x128xi32>
      %40 = arith.addi %39, %35 : vector<16x128xi32>
      %c2048_i32_13 = arith.constant 2048 : i32
      %41 = vector.broadcast %c2048_i32_13 : i32 to vector<16x128xi32>
      %42 = arith.cmpi slt, %40, %41 : vector<16x128xi32>
      %cst_14 = arith.constant 0.000000e+00 : f32
      %43 = vector.broadcast %cst_14 : f32 to vector<16x128xf32>
      %44 = arith.select %42, %26, %43 : vector<16x128xi1>, vector<16x128xf32>
      %c0_15 = arith.constant 0 : index
      %c0_16 = arith.constant 0 : index
      %45 = vector.load %arg4[%c0_15, %c0_16] : memref<8x128xf32, #tpu.memory_space<vmem>>, vector<8x128xf32>
      %46 = vector.shape_cast %44 : vector<16x128xf32> to vector<2x8x128xf32>
      %cst_17 = arith.constant dense<0.000000e+00> : vector<8x128xf32>
      %47 = vector.multi_reduction <add>, %46, %cst_17 [0] : vector<2x8x128xf32> to vector<8x128xf32>
      %48 = arith.addf %45, %47 : vector<8x128xf32>
      %c0_18 = arith.constant 0 : index
      %c0_19 = arith.constant 0 : index
      %49 = vector.load %arg4[%c0_18, %c0_19] : memref<8x128xf32, #tpu.memory_space<vmem>>, vector<8x128xf32>
      tpu.vector_store %arg4[%c0_18, %c0_19], %48 {strides = array<i32>} : memref<8x128xf32, #tpu.memory_space<vmem>>, vector<8x128xf32>,
      %c0_20 = arith.constant 0 : index
      %c0_21 = arith.constant 0 : index
      %50 = vector.load %arg4[%c0_20, %c0_21] : memref<8x128xf32, #tpu.memory_space<vmem>>, vector<8x128xf32>
      %cst_22 = arith.constant dense<0.000000e+00> : vector<128xf32>
      %51 = vector.multi_reduction <add>, %50, %cst_22 [0] : vector<8x128xf32> to vector<128xf32>
      %52 = vector.shape_cast %51 : vector<128xf32> to vector<1x128xf32>
      %c0_23 = arith.constant 0 : index
      %c0_24 = arith.constant 0 : index
      %53 = vector.load %arg3[%c0_23, %c0_24] : memref<1x128xf32, #tpu.memory_space<vmem>>, vector<1x128xf32>
      tpu.vector_store %arg3[%c0_23, %c0_24], %52 {strides = array<i32>} : memref<1x128xf32, #tpu.memory_space<vmem>>, vector<1x128xf32>,
    } else {
    }
    return
  }
  func.func @transform_0(%arg0: i32) -> (i32, i32) {
    %c0_i32 = arith.constant 0 : i32
    %c0_i32_0 = arith.constant 0 : i32
    return %arg0, %c0_i32 : i32, i32
  }
  func.func @transform_1(%arg0: i32) -> (i32, i32) {
    %c0_i32 = arith.constant 0 : i32
    %c0_i32_0 = arith.constant 0 : i32
    return %arg0, %c0_i32 : i32, i32
  }
  func.func @transform_2(%arg0: i32) -> (i32, i32) {
    %c0_i32 = arith.constant 0 : i32
    %c0_i32_0 = arith.constant 0 : i32
    %c0_i32_1 = arith.constant 0 : i32
    return %c0_i32, %c0_i32_0 : i32, i32
  }
}

</mosaic_0001>

<llo_original>
// kernel: tpu_custom_call.1
$region0: #{tpu_custom_call.1}
  #allocation0 [shape = 'u32[]', space=smem, size = 0x4, offset = 0x4, fixed_abs, tag = 'smem constant byte address 0x4 - core index']
  #allocation1 [shape = 'u32[144,128]{1,0:T(1,128)}', space=vmem, size = 0x12000, scoped, tag = 'internal scratch']
  #allocation2 [shape = 'f32[8,128]{1,0:T(8,128)}', space=vmem, size = 0x1000, scoped, tag = 'scratch operand']
  %s0 = inlined_call_operand.hbm [shape: f32[16,128], index: 0, kind: input, shape index: {}]
  %s1 = inlined_call_operand.hbm [shape: f32[16,128], index: 1, kind: input, shape index: {}]
  %s2 = inlined_call_operand.hbm [shape: f32[1,128], index: 2, kind: output, shape index: {}]
  %s3 = sld [smem:[#allocation0]]
  $region38: #{tpu_custom_call.1} parent=0
    _
  %s5 = ssub.s32 1, %s3
  %s6 = scalar_select 0, %s5, %s3
  $region1: #{tpu_custom_call.1} parent=0
    #allocation3 [shape = 'u8[8192]{0}', space=vmem, size = 0x2000, scoped, tag = 'input window, operand 0, single buffered']
    #allocation4 [shape = 's32[1]{0}', space=sflag, size = 0x4, scoped, tag = 'scoped memory for tpu_custom_call.1']
    #allocation5 [shape = 's32[1]{0}', space=sflag, size = 0x4, scoped, tag = 'scoped memory for tpu_custom_call.1']
    #allocation6 [shape = 'u8[8192]{0}', space=vmem, size = 0x2000, scoped, tag = 'input window, operand 1, single buffered']
    #allocation7 [shape = 's32[1]{0}', space=sflag, size = 0x4, scoped, tag = 'scoped memory for tpu_custom_call.1']
    #allocation8 [shape = 'u8[512]{0}', space=vmem, size = 0x400, scoped, tag = 'output window, operand 0, single buffered']
    %7 = vsyncpa [#allocation4], 0
    %8 = vsyncpa [#allocation7], 0
    %9 = vsyncpa [#allocation5], 0
    // Predicated region
    $region2: #{tpu_custom_call.1} parent=1 // pred_check
      _
    $region3: #{tpu_custom_call.1} parent=1 // pred_check_branch
      %11 = sbr.rel (0) target = $region5
    $region4: #{tpu_custom_call.1} parent=1 // pred_region
      %s13 = ssub.s32 256, 256
      %14 = vsyncadd [#allocation4], %s13
      %s15 = sshll.u32 [#allocation3], 4
      %s16 = int_to_ptr.vmem [resolvable:$true] %s15
      %21 = dma.hbm_to_vmem [thread:$0]  %s0, 256, %s16, [#allocation4], 128, 128, 8
    $region5: #{tpu_custom_call.1} parent=1 // pred_fallthru
      _
    // Predicated region
    $region6: #{tpu_custom_call.1} parent=1 // pred_check
      _
    $region7: #{tpu_custom_call.1} parent=1 // pred_check_branch
      %23 = sbr.rel (0) target = $region9
    $region8: #{tpu_custom_call.1} parent=1 // pred_region
      %s25 = ssub.s32 256, 256
      %26 = vsyncadd [#allocation7], %s25
      %s27 = sshll.u32 [#allocation6], 4
      %s28 = int_to_ptr.vmem [resolvable:$true] %s27
      %33 = dma.hbm_to_vmem [thread:$0]  %s1, 256, %s28, [#allocation7], 128, 128, 8
    $region9: #{tpu_custom_call.1} parent=1 // pred_fallthru
      _
    // Predicated region
    $region10: #{tpu_custom_call.1} parent=1 // pred_check
      _
    $region11: #{tpu_custom_call.1} parent=1 // pred_check_branch
      %35 = sbr.rel (0) target = $region13
    $region12: #{tpu_custom_call.1} parent=1 // pred_region
      %36 = dma.done [#allocation4], 256
    $region13: #{tpu_custom_call.1} parent=1 // pred_fallthru
      _
    // Predicated region
    $region14: #{tpu_custom_call.1} parent=1 // pred_check
      _
    $region15: #{tpu_custom_call.1} parent=1 // pred_check_branch
      %38 = sbr.rel (0) target = $region17
    $region16: #{tpu_custom_call.1} parent=1 // pred_region
      %39 = dma.done [#allocation7], 256
    $region17: #{tpu_custom_call.1} parent=1 // pred_fallthru
      _
    %p40 = scmp.eq.s32.totalorder 0, 0
    // Predicated region
    $region18: #{tpu_custom_call.1} parent=1 // pred_check
      %p41 = pneg %p40
    $region19: #{tpu_custom_call.1} parent=1 // pred_check_branch
      %43 = sbr.rel (%p41) target = $region21
    $region20: #{tpu_custom_call.1} parent=1 // pred_region
      %44 = vst [vmem:[#allocation2] sm:$0xff] 0.0
    $region21: #{tpu_custom_call.1} parent=1 // pred_fallthru
      _
    %v45 = vld [vmem:[#allocation3] sm:$0xff]
    %v46 = vld [vmem:[#allocation3 + $0x8] sm:$0xff]
    %v47 = vld [vmem:[#allocation6] sm:$0xff]
    %v48 = vld [vmem:[#allocation6 + $0x8] sm:$0xff]
    %v49 = vmax.f32 %v45, 0.0
    %v50 = vmax.f32 %v46, 0.0
    %v51 = vand.u32 2147483647, %v45
    %v52 = vand.u32 2147483647, %v46
    %v53 = vsub.f32 0.0, %v51
    %v54 = vsub.f32 0.0, %v52
    %v55 = vmul.f32 %v53, 1.442695
    %v56 = vpow.pop %v55
    %v57 = vmul.f32 %v54, 1.442695
    %v58 = vpow.pop %v57
    %v59 = vadd.f32 %v56, 1.0
    %v60 = vlog2.pop %v59
    %v61 = vmul.f32 %v60, 0.6931472
    %v62 = vmul.f32 -0.5, %v56
    %v63 = vadd.f32 %v62, 1.0
    %v64 = vmul.f32 %v63, %v56
    %v65 = vand.u32 2147483647, %v56
    %vm66 = vcmp.lt.f32.partialorder %v65, 0.0004427343
    %v67 = vsel %vm66, %v64, %v61
    %v68 = vadd.f32 %v58, 1.0
    %v69 = vlog2.pop %v68
    %v70 = vmul.f32 %v69, 0.6931472
    %v71 = vmul.f32 -0.5, %v58
    %v72 = vadd.f32 %v71, 1.0
    %v73 = vmul.f32 %v72, %v58
    %v74 = vand.u32 2147483647, %v58
    %vm75 = vcmp.lt.f32.partialorder %v74, 0.0004427343
    %v76 = vsel %vm75, %v73, %v70
    %v77 = vadd.f32 %v49, %v67
    %v78 = vadd.f32 %v50, %v76
    %v79 = vsub.f32 %v45, %v77
    %v80 = vsub.f32 %v46, %v78
    %v81 = vmax.f32 %v79, -100.0
    %v82 = vmax.f32 %v80, -100.0
    %v83 = vsub.f32 0.0, %v77
    %v84 = vsub.f32 0.0, %v78
    %v85 = vmax.f32 %v83, -100.0
    %v86 = vmax.f32 %v84, -100.0
    %v87 = vmul.f32 %v47, %v81
    %v88 = vmul.f32 %v48, %v82
    %v89 = vsub.f32 1.0, %v47
    %v90 = vsub.f32 1.0, %v48
    %v91 = vmul.f32 %v89, %v85
    %v92 = vmul.f32 %v90, %v86
    %v93 = vadd.f32 %v87, %v91
    %v94 = vadd.f32 %v88, %v92
    %v95 = vsub.f32 0.0, %v93
    %v96 = vsub.f32 0.0, %v94
    %p97 = scmp.ne.s32.totalorder 0, 0
    // Predicated region
    $region22: #{tpu_custom_call.1} parent=1 // pred_check
      %p98 = pneg %p97
    $region23: #{tpu_custom_call.1} parent=1 // pred_check_branch
      %100 = sbr.rel (%p98) target = $region25
    $region24: #{tpu_custom_call.1} parent=1 // pred_region
      %v101 = vld [vmem:[#allocation2] sm:$0xff]
      %v102 = vadd.f32 %v95, %v96
      %v103 = vadd.f32 %v101, %v102
      %104 = vst [vmem:[#allocation2] sm:$0xff] %v103
    $region25: #{tpu_custom_call.1} parent=1 // pred_fallthru
      _
    // Predicated region
    $region26: #{tpu_custom_call.1} parent=1 // pred_check
      %p105 = pneg %p40
    $region27: #{tpu_custom_call.1} parent=1 // pred_check_branch
      %107 = sbr.rel (%p105) target = $region29
    $region28: #{tpu_custom_call.1} parent=1 // pred_region
      %s108 = smul.u32 0, 2048
      %v109 = vlaneseq
      %v110 = vshrl.u32 %v109, 7
      %v111 = vadd.s32 %v110, 8
      %v112 = vlaneseq
      %v113 = vand.u32 %v112, 127
      %v114 = vmul.u32 %v110, 128
      %v115 = vmul.u32 %v111, 128
      %v116 = vstv %s108
      %v117 = vadd.s32 %v116, %v114
      %v118 = vadd.s32 %v116, %v115
      %v119 = vadd.s32 %v117, %v113
      %v120 = vadd.s32 %v118, %v113
      %vm121 = vcmp.lt.s32.totalorder %v119, 2048
      %vm122 = vcmp.lt.s32.totalorder %v120, 2048
      %v123 = vsel %vm121, %v95, 0.0
      %v124 = vsel %vm122, %v96, 0.0
      %v125 = vld [vmem:[#allocation2] sm:$0xff]
      %v126 = vadd.f32 %v123, %v124
      %v127 = vadd.f32 %v125, %v126
      %128 = vst [vmem:[#allocation2] sm:$0xff] %v127
      %v129 = vld [vmem:[#allocation2] sm:$0xff]
      %v130 = vrot.slane %v129, 4
      %v131 = vadd.f32 %v129, %v130
      %v132 = vrot.slane %v131, 2
      %v133 = vadd.f32 %v131, %v132
      %v134 = vrot.slane %v133, 1
      %v135 = vadd.f32 %v133, %v134
      %136 = vst [vmem:[#allocation8] sm:$0x1] %v135
    $region29: #{tpu_custom_call.1} parent=1 // pred_fallthru
      _
    // Predicated region
    $region30: #{tpu_custom_call.1} parent=1 // pred_check
      _
    $region31: #{tpu_custom_call.1} parent=1 // pred_check_branch
      %138 = sbr.rel (0) target = $region33
    $region32: #{tpu_custom_call.1} parent=1 // pred_region
      %s140 = ssub.s32 16, 16
      %141 = vsyncadd [#allocation5], %s140
      %s143 = sshll.u32 [#allocation8], 4
      %s144 = int_to_ptr.vmem [resolvable:$true] %s143
      %146 = dma.vmem_to_hbm [thread:$0]  %s144, 16, %s2, [#allocation5]
    $region33: #{tpu_custom_call.1} parent=1 // pred_fallthru
      _
    // Predicated region
    $region34: #{tpu_custom_call.1} parent=1 // pred_check
      _
    $region35: #{tpu_custom_call.1} parent=1 // pred_check_branch
      %148 = sbr.rel (0) target = $region37
    $region36: #{tpu_custom_call.1} parent=1 // pred_region
      %149 = dma.done [#allocation5], 16
    $region37: #{tpu_custom_call.1} parent=1 // pred_fallthru
      _
    %150 = vsyncpa [#allocation4], 1
    %151 = vsyncpa [#allocation7], 1
    %152 = vsyncpa [#allocation5], 1

</llo_original>
